<compile_context>
chip_gen: v5e
topology: v5e:2x2
jax: 0.10.0
libtpu: 0.0.40
codegen_flags: <defaults>
</compile_context>

<pallas_src>
import math

import jax
import jax.numpy as jnp
from jax.experimental import pallas as pl
from jax.experimental.pallas import tpu as pltpu

_LANE = 128
_TILE_BYTE_BUDGET = 6 * 1024 * 1024     # per output block; x2 (double-buffered
                                        # output) stays under the 16 MiB scoped
                                        # VMEM default on v5e, well under v6e/v7x.
_FAST_PATH_BYTES = 1 << 20              # below ~1 MiB launch overhead dominates


def _fill_kernel(value_ref, o_ref):
    # value_ref: (1,) 32-bit SMEM carrier.  Splat + cast is VPU work that hides
    # entirely under the store slot; this kernel is pure HBM-writeback bound.
    o_ref[...] = jnp.full(o_ref.shape, value_ref[0], dtype=o_ref.dtype)


def _sublane_multiple(itemsize: int) -> int:
    # Sub-32-bit dtypes pack along sublanes: 8 rows for 32-bit, 16 for 16-bit,
    # 32 for 8-bit keeps stores fully packed / unmasked.
    return {4: 8, 2: 16, 1: 32}.get(itemsize, 8)


def _round_up(x: int, m: int) -> int:
    return -(-x // m) * m


def _choose_block(size, itemsize, sublane):
    """Greedy biggest-first block for an ndim>=2 output under the VMEM budget.

    Trailing two block dims are either the full array extent or multiples of
    (sublane, 128); leading dims only grow while all inner dims are full so each
    extra leading index adds a whole contiguous inner slab.
    """
    budget = max(_LANE * sublane, _TILE_BYTE_BUDGET // itemsize)   # elements
    R, C = size[-2], size[-1]

    # Lane (minor) dim.  Budget with `sublane` rows so that physical sublane
    # padding of short row extents can never blow VMEM.
    lane_budget = max(_LANE, budget // sublane)
    tc = C if C <= lane_budget else max(_LANE, (lane_budget // _LANE) * _LANE)
    rem = max(1, budget // tc)

    # Sublane dim: full extent or a sublane-aligned tile.
    if R <= rem or R <= sublane:
        tr = R
    else:
        tr = max(sublane, (rem // sublane) * sublane)
    rem = max(1, rem // max(1, tr))

    # Leading dims, innermost first.
    lead = list(size[:-2])
    blead = [1] * len(lead)
    inner_full = (tc == C and tr == R)
    for i in range(len(lead) - 1, -1, -1):
        if not inner_full:
            break
        d = lead[i]
        if d <= rem:
            blead[i] = d
            rem = max(1, rem // d)
        else:
            blead[i] = max(1, rem)
            inner_full = False

    block = tuple(blead) + (tr, tc)
    grid = tuple(pl.cdiv(d, b) for d, b in zip(size, block))

    # Megacore: if the whole fill collapsed into one block, split rows so both
    # TensorCores (v7x) share the writeback.
    if math.prod(grid) == 1 and R >= 2 * sublane:
        tr = _round_up(-(-R // 2), sublane)
        block = tuple(blead) + (tr, tc)
        grid = tuple(pl.cdiv(d, b) for d, b in zip(size, block))
    return block, grid


def new_full(tensor: jax.Array, size, value, dtype=None):
    """Pallas equivalent of torch.ops.aten.new_full.default."""
    out_dtype = jnp.dtype(dtype) if dtype is not None else tensor.dtype
    size = tuple(int(s) for s in size)
    total = math.prod(size) if size else 1
    itemsize = out_dtype.itemsize

    # Fast paths: tiny fills are dominated by launch / grid-step overhead, and
    # 0-D / 1-D outputs have degenerate tiled layouts — XLA's native broadcast
    # is optimal there.  Complex fills need a two-word carrier.
    # TODO(synk): route large 1-D and complex fills through the kernel.
    if (total * itemsize < _FAST_PATH_BYTES
            or len(size) < 2
            or jnp.issubdtype(out_dtype, jnp.complexfloating)):
        return jnp.full(size, value, dtype=out_dtype)

    sublane = _sublane_multiple(itemsize)
    block, grid = _choose_block(size, itemsize, sublane)

    # TODO(synk): outputs with last dim < 128 produce lane-masked stores; that
    # is inherent to the requested layout (any producer writes the same bytes).

    # Carry the fill value as a 32-bit SMEM scalar (cast to out_dtype first,
    # then widen, so the in-kernel downcast is bit-exact).
    val = jnp.asarray(value, dtype=out_dtype)
    carrier_dtype = (jnp.float32 if jnp.issubdtype(out_dtype, jnp.floating)
                     else jnp.int32)
    carrier = val.astype(carrier_dtype).reshape(1)

    return pl.pallas_call(
        _fill_kernel,
        out_shape=jax.ShapeDtypeStruct(size, out_dtype),
        grid_spec=pltpu.PrefetchScalarGridSpec(
            num_scalar_prefetch=0,
            grid=grid,
            in_specs=[pl.BlockSpec(memory_space=pltpu.SMEM)],
            out_specs=pl.BlockSpec(block, lambda *idx: idx),
        ),
        compiler_params=pltpu.CompilerParams(
            dimension_semantics=("parallel",) * len(grid),
        ),
    )(carrier)


if __name__ == "__main__":
    key = jax.random.PRNGKey(0)

    # Source tensor (only its dtype matters as a default for new_full).
    x = jax.random.normal(key, (2, 4, 16, 16), dtype=jnp.float32)

    # Case 1: explicit f32 dtype, large enough to exercise the Pallas kernel.
    size1 = (512, 1024)
    out1 = jax.block_until_ready(new_full(x, size1, 3.5, dtype=jnp.float32))
    assert out1.shape == size1 and out1.dtype == jnp.float32
    assert bool(jnp.all(out1 == 3.5))

    # Case 2: dtype=None -> inherit from source; unaligned dims, kernel path.
    size2 = (300, 1001)
    out2 = jax.block_until_ready(new_full(x, size2, -2.0, dtype=None))
    assert out2.shape == size2 and out2.dtype == x.dtype
    assert bool(jnp.all(out2 == -2.0))

    # Case 3: bf16 output (16-sublane packing path), kernel path.
    size3 = (768, 1024)
    out3 = jax.block_until_ready(new_full(x, size3, 1.25, dtype=jnp.bfloat16))
    assert out3.shape == size3 and out3.dtype == jnp.bfloat16
    assert bool(jnp.all(out3 == jnp.bfloat16(1.25)))

    # Case 4: 4-D output, kernel path with leading-dim blocking (no reshape).
    size4 = (2, 4, 256, 256)
    out4 = jax.block_until_ready(new_full(x, size4, -1.0, dtype=jnp.float32))
    assert out4.shape == size4 and out4.dtype == jnp.float32
    assert bool(jnp.all(out4 == -1.0))

    # Case 5: integer dtype, small -> jnp.full fast path.
    size5 = (16, 128)
    out5 = jax.block_until_ready(new_full(x, size5, 7, dtype=jnp.int32))
    assert out5.shape == size5 and out5.dtype == jnp.int32
    assert bool(jnp.all(out5 == 7))

    # Case 6: tiny odd size, dtype=None -> fast path.
    size6 = (3, 5, 7)
    out6 = jax.block_until_ready(new_full(x, size6, 0.5, dtype=None))
    assert out6.shape == size6 and out6.dtype == x.dtype
    assert bool(jnp.all(out6 == 0.5))

    print("KERNEL_OK")
</pallas_src>

<mosaic_0001>
module attributes {stable_mosaic.version = 11 : i64} {
  func.func @_fill_kernel(%arg0: i32, %arg1: i32, %arg2: memref<1xf32, #tpu.memory_space<smem>>, %arg3: memref<256x1024xf32, #tpu.memory_space<vmem>>) attributes {dimension_semantics = [#tpu.dimension_semantics<parallel>, #tpu.dimension_semantics<parallel>], iteration_bounds = array<i64: 2, 1>, scalar_prefetch = 0 : i64, scratch_operands = 0 : i64, tpu.core_type = #tpu.core_type<tc>, window_params = [{transform_indices = @transform_0, window_bounds = array<i64: 1>}, {transform_indices = @transform_1, window_bounds = array<i64: 256, 1024>}]} {
    %c0 = arith.constant 0 : index
    %0 = memref.load %arg2[%c0] : memref<1xf32, #tpu.memory_space<smem>>
    %1 = vector.broadcast %0 : f32 to vector<256x1024xf32>
    %c0_0 = arith.constant 0 : index
    %c0_1 = arith.constant 0 : index
    %2 = vector.load %arg3[%c0_0, %c0_1] : memref<256x1024xf32, #tpu.memory_space<vmem>>, vector<256x1024xf32>
    tpu.vector_store %arg3[%c0_0, %c0_1], %1 {strides = array<i32>} : memref<256x1024xf32, #tpu.memory_space<vmem>>, vector<256x1024xf32>,
    return
  }
  func.func @transform_0(%arg0: i32, %arg1: i32) -> i32 {
    %c0_i32 = arith.constant 0 : i32
    %c0_i32_0 = arith.constant 0 : i32
    return %c0_i32 : i32
  }
  func.func @transform_1(%arg0: i32, %arg1: i32) -> (i32, i32) {
    %c0_i32 = arith.constant 0 : i32
    return %arg0, %arg1 : i32, i32
  }
}

</mosaic_0001>

<llo_original>
// kernel: tpu_custom_call.1
$region0: #{tpu_custom_call.1}
  #allocation0 [shape = 'u32[]', space=smem, size = 0x4, offset = 0x4, fixed_abs, tag = 'smem constant byte address 0x4 - core index']
  #allocation1 [shape = 'u32[72,128]{1,0:T(1,128)}', space=vmem, size = 0x9000, scoped, tag = 'internal scratch']
  #allocation2 [shape = 'f32[1]{0:T(128)S(6)}', space=smem, size = 0x200, scoped, tag = 'scoped memory for tpu_custom_call.1']
  %s0 = inlined_call_operand.<no memory space> [shape: f32[1], index: 0, kind: input, shape index: {}]
  %s1 = inlined_call_operand.hbm [shape: f32[512,1024], index: 1, kind: output, shape index: {}]
  %s2 = sld [smem:[#allocation0]]
  $region37: #{tpu_custom_call.1} parent=0
    _
  %s4 = ssub.s32 1, %s2
  %s5 = scalar_select 0, %s4, %s2
  %6 = sst [smem:[#allocation2]] %s0
  $region1: #{tpu_custom_call.1} parent=0
    #allocation3 [shape = 'u8[2097152]{0}', space=vmem, size = 0x200000, scoped, tag = 'output window, operand 0']
    #allocation4 [shape = 's32[2]{0}', space=sflag, size = 0x8, scoped, tag = 'scoped memory for tpu_custom_call.1']
    %7 = vsyncpa [#allocation4], 0
    %s8 = scalar_lea.sflag [#allocation4], 1
    %9 = vsyncpa %s8, 0
    loop: start=0, step=1, limit=4
    $region2: #{tpu_custom_call.1} parent=1 // loop_pre_header
      _
    $region3: #{tpu_custom_call.1} parent=1 // loop_header
      %s11 = sphi 0, %s15
      %p12 = scmp.ge.s32.totalorder %s11, 4
      %s18 = sphi 0, %s30
      %s19 = sphi 0, %s26
      %s20 = sphi 0, %s18
      %s21 = sphi 0, %s19
      %s22 = sphi 0, %s20
      %s23 = sphi 0, %s21
      %s31 = sphi 0, %s31
      %s33 = sphi 0, %s31
      %s34 = sphi 0, %s33
      %s48 = sphi 0, %s34
      %s56 = sphi 0, %s58
      %s59 = sphi 0, %s56
      %s60 = sphi 0, %s59
      %s76 = sphi 0, %s60
    $region4: #{tpu_custom_call.1} parent=1 // loop_header_branch
      %14 = sbr.rel (%p12) target = $region8
    $region5: #{tpu_custom_call.1} parent=1 // loop_body
      %s16 = ssub.s32 %s11, 1
      %s17 = ssub.s32 %s11, 2
      %s24 = sadd.s32 1, %s19
      %p25 = scmp.ge.s32.totalorder %s24, 1
      %s26 = scalar_select %p25, 0, %s24
      %s27 = sadd.s32 1, %s18
      %s28 = scalar_select %p25, %s27, %s18
      %p29 = scmp.ge.s32.totalorder %s28, 2
      %s30 = scalar_select %p29, 0, %s28
      %s32 = sadd.s32 %s31, 1
      %p35 = scmp.eq.s32.totalorder %s11, 1
      %p36 = scmp.ne.s32.totalorder %s31, %s33
      %p37 = scmp.eq.s32.totalorder %s11, 0
      %p38 = por %p36, %p37
      %p39 = scmp.ne.s32.totalorder %s31, %s33
      %p40 = scmp.eq.s32.totalorder %s16, 1
      %p41 = por %p39, %p40
      %p42 = scmp.ne.s32.totalorder %s33, %s34
      %p43 = scmp.eq.s32.totalorder %s16, 0
      %p44 = por %p42, %p43
      %p45 = scmp.ne.s32.totalorder %s33, %s34
      %p46 = scmp.eq.s32.totalorder %s17, 1
      %p47 = por %p45, %p46
      %p49 = scmp.ne.s32.totalorder %s34, %s48
      %p50 = scmp.eq.s32.totalorder %s17, 0
      %p51 = por %p49, %p50
      %s52 = ssub.s32 %s18, %s30
      %s53 = ssub.s32 %s19, %s26
      %s54 = sor.u32 %s52, %s53
      %p55 = scmp.eq.s32.totalorder %s54, 0
      %s57 = sadd.s32 %s56, 1
      %s58 = scalar_select %p55, %s56, %s57
      %p61 = pneg %p55
      %p62 = scmp.eq.s32.totalorder %s11, 1
      %p63 = por %p61, %p62
      %p64 = scmp.ne.s32.totalorder %s56, %s59
      %p65 = scmp.eq.s32.totalorder %s11, 0
      %p66 = por %p64, %p65
      %p67 = scmp.ne.s32.totalorder %s56, %s59
      %p68 = scmp.eq.s32.totalorder %s16, 1
      %p69 = por %p67, %p68
      %p70 = scmp.ne.s32.totalorder %s59, %s60
      %p71 = scmp.eq.s32.totalorder %s16, 0
      %p72 = por %p70, %p71
      %p73 = scmp.ne.s32.totalorder %s59, %s60
      %p74 = scmp.eq.s32.totalorder %s17, 1
      %p75 = por %p73, %p74
      %p77 = scmp.ne.s32.totalorder %s60, %s76
      %p78 = scmp.eq.s32.totalorder %s17, 0
      %p79 = por %p77, %p78
      %p80 = scmp.le.s32.totalorder 1, %s11
      %p81 = scmp.lt.s32.totalorder %s11, 3
      %p82 = pnand %p80, %p81
      %p83 = pneg %p82
      // Predicated region
      $region9: #{tpu_custom_call.1} parent=5 // pred_check
        _
      $region10: #{tpu_custom_call.1} parent=5 // pred_check_branch
        %85 = sbr.rel (%p82) target = $region12
      $region11: #{tpu_custom_call.1} parent=5 // pred_region
        %s86 = ssub.s32 %s11, 1
        // Predicated region
        $region13: #{tpu_custom_call.1} parent=11 // pred_check
          %p87 = pneg %p44
        $region14: #{tpu_custom_call.1} parent=11 // pred_check_branch
          %89 = sbr.rel (%p87) target = $region16
        $region15: #{tpu_custom_call.1} parent=11 // pred_region
          _
        $region16: #{tpu_custom_call.1} parent=11 // pred_fallthru
          _
      $region12: #{tpu_custom_call.1} parent=5 // pred_fallthru
        _
      %p90 = scmp.lt.s32.totalorder %s11, 2
      // Predicated region
      $region17: #{tpu_custom_call.1} parent=5 // pred_check
        %p91 = pneg %p90
      $region18: #{tpu_custom_call.1} parent=5 // pred_check_branch
        %93 = sbr.rel (%p91) target = $region20
      $region19: #{tpu_custom_call.1} parent=5 // pred_region
        _
      $region20: #{tpu_custom_call.1} parent=5 // pred_fallthru
        _
      %p94 = scmp.le.s32.totalorder 1, %s11
      %p95 = scmp.lt.s32.totalorder %s11, 3
      %p96 = pnand %p94, %p95
      %p97 = pneg %p96
      // Predicated region
      $region21: #{tpu_custom_call.1} parent=5 // pred_check
        _
      $region22: #{tpu_custom_call.1} parent=5 // pred_check_branch
        %99 = sbr.rel (%p96) target = $region24
      $region23: #{tpu_custom_call.1} parent=5 // pred_region
        %s100 = ssub.s32 %s11, 1
        %p101 = pneg %p44
        %p102 = pneg %p41
        %p103 = pneg %p72
        %p104 = pneg %p69
        %s105 = sand.u32 %s59, 1
        %s106 = scalar_lea.sflag [#allocation4], %s105
        %s107 = sand.u32 %s59, 1
        %s108 = smul.addr %s107, 2048
        %s109 = scalar_lea.vmem [#allocation3], %s108
        %s110 = smul.u32 32, %s20
        %s111 = smul.u32 8, %s21
        %s112 = sld [smem:[#allocation2]]
        %v113 = vstv %s112
        %114 = vst [vmem:[%s109] sm:$0xff] %v113
        %115 = vst [vmem:[%s109 + $0x8] sm:$0xff] %v113
        %116 = vst [vmem:[%s109 + $0x10] sm:$0xff] %v113
        %117 = vst [vmem:[%s109 + $0x18] sm:$0xff] %v113
        %118 = vst [vmem:[%s109 + $0x20] sm:$0xff] %v113
        %119 = vst [vmem:[%s109 + $0x28] sm:$0xff] %v113
        %120 = vst [vmem:[%s109 + $0x30] sm:$0xff] %v113
        %121 = vst [vmem:[%s109 + $0x38] sm:$0xff] %v113
        %122 = vst [vmem:[%s109 + $0x40] sm:$0xff] %v113
        %123 = vst [vmem:[%s109 + $0x48] sm:$0xff] %v113
        %124 = vst [vmem:[%s109 + $0x50] sm:$0xff] %v113
        %125 = vst [vmem:[%s109 + $0x58] sm:$0xff] %v113
        %126 = vst [vmem:[%s109 + $0x60] sm:$0xff] %v113
        %127 = vst [vmem:[%s109 + $0x68] sm:$0xff] %v113
        %128 = vst [vmem:[%s109 + $0x70] sm:$0xff] %v113
        %129 = vst [vmem:[%s109 + $0x78] sm:$0xff] %v113
        %130 = vst [vmem:[%s109 + $0x80] sm:$0xff] %v113
        %131 = vst [vmem:[%s109 + $0x88] sm:$0xff] %v113
        %132 = vst [vmem:[%s109 + $0x90] sm:$0xff] %v113
        %133 = vst [vmem:[%s109 + $0x98] sm:$0xff] %v113
        %134 = vst [vmem:[%s109 + $0xa0] sm:$0xff] %v113
        %135 = vst [vmem:[%s109 + $0xa8] sm:$0xff] %v113
        %136 = vst [vmem:[%s109 + $0xb0] sm:$0xff] %v113
        %137 = vst [vmem:[%s109 + $0xb8] sm:$0xff] %v113
        %138 = vst [vmem:[%s109 + $0xc0] sm:$0xff] %v113
        %139 = vst [vmem:[%s109 + $0xc8] sm:$0xff] %v113
        %140 = vst [vmem:[%s109 + $0xd0] sm:$0xff] %v113
        %141 = vst [vmem:[%s109 + $0xd8] sm:$0xff] %v113
        %142 = vst [vmem:[%s109 + $0xe0] sm:$0xff] %v113
        %143 = vst [vmem:[%s109 + $0xe8] sm:$0xff] %v113
        %144 = vst [vmem:[%s109 + $0xf0] sm:$0xff] %v113
        %145 = vst [vmem:[%s109 + $0xf8] sm:$0xff] %v113
        %146 = vst [vmem:[%s109 + $0x100] sm:$0xff] %v113
        %147 = vst [vmem:[%s109 + $0x108] sm:$0xff] %v113
        %148 = vst [vmem:[%s109 + $0x110] sm:$0xff] %v113
        %149 = vst [vmem:[%s109 + $0x118] sm:$0xff] %v113
        %150 = vst [vmem:[%s109 + $0x120] sm:$0xff] %v113
        %151 = vst [vmem:[%s109 + $0x128] sm:$0xff] %v113
        %152 = vst [vmem:[%s109 + $0x130] sm:$0xff] %v113
        %153 = vst [vmem:[%s109 + $0x138] sm:$0xff] %v113
        %154 = vst [vmem:[%s109 + $0x140] sm:$0xff] %v113
        %155 = vst [vmem:[%s109 + $0x148] sm:$0xff] %v113
        %156 = vst [vmem:[%s109 + $0x150] sm:$0xff] %v113
        %157 = vst [vmem:[%s109 + $0x158] sm:$0xff] %v113
        %158 = vst [vmem:[%s109 + $0x160] sm:$0xff] %v113
        %159 = vst [vmem:[%s109 + $0x168] sm:$0xff] %v113
        %160 = vst [vmem:[%s109 + $0x170] sm:$0xff] %v113
        %161 = vst [vmem:[%s109 + $0x178] sm:$0xff] %v113
        %162 = vst [vmem:[%s109 + $0x180] sm:$0xff] %v113
        %163 = vst [vmem:[%s109 + $0x188] sm:$0xff] %v113
        %164 = vst [vmem:[%s109 + $0x190] sm:$0xff] %v113
        %165 = vst [vmem:[%s109 + $0x198] sm:$0xff] %v113
        %166 = vst [vmem:[%s109 + $0x1a0] sm:$0xff] %v113
        %167 = vst [vmem:[%s109 + $0x1a8] sm:$0xff] %v113
        %168 = vst [vmem:[%s109 + $0x1b0] sm:$0xff] %v113
        %169 = vst [vmem:[%s109 + $0x1b8] sm:$0xff] %v113
        %170 = vst [vmem:[%s109 + $0x1c0] sm:$0xff] %v113
        %171 = vst [vmem:[%s109 + $0x1c8] sm:$0xff] %v113
        %172 = vst [vmem:[%s109 + $0x1d0] sm:$0xff] %v113
        %173 = vst [vmem:[%s109 + $0x1d8] sm:$0xff] %v113
        %174 = vst [vmem:[%s109 + $0x1e0] sm:$0xff] %v113
        %175 = vst [vmem:[%s109 + $0x1e8] sm:$0xff] %v113
        %176 = vst [vmem:[%s109 + $0x1f0] sm:$0xff] %v113
        %177 = vst [vmem:[%s109 + $0x1f8] sm:$0xff] %v113
        %178 = vst [vmem:[%s109 + $0x200] sm:$0xff] %v113
        %179 = vst [vmem:[%s109 + $0x208] sm:$0xff] %v113
        %180 = vst [vmem:[%s109 + $0x210] sm:$0xff] %v113
        %181 = vst [vmem:[%s109 + $0x218] sm:$0xff] %v113
        %182 = vst [vmem:[%s109 + $0x220] sm:$0xff] %v113
        %183 = vst [vmem:[%s109 + $0x228] sm:$0xff] %v113
        %184 = vst [vmem:[%s109 + $0x230] sm:$0xff] %v113
        %185 = vst [vmem:[%s109 + $0x238] sm:$0xff] %v113
        %186 = vst [vmem:[%s109 + $0x240] sm:$0xff] %v113
        %187 = vst [vmem:[%s109 + $0x248] sm:$0xff] %v113
        %188 = vst [vmem:[%s109 + $0x250] sm:$0xff] %v113
        %189 = vst [vmem:[%s109 + $0x258] sm:$0xff] %v113
        %190 = vst [vmem:[%s109 + $0x260] sm:$0xff] %v113
        %191 = vst [vmem:[%s109 + $0x268] sm:$0xff] %v113
        %192 = vst [vmem:[%s109 + $0x270] sm:$0xff] %v113
        %193 = vst [vmem:[%s109 + $0x278] sm:$0xff] %v113
        %194 = vst [vmem:[%s109 + $0x280] sm:$0xff] %v113
        %195 = vst [vmem:[%s109 + $0x288] sm:$0xff] %v113
        %196 = vst [vmem:[%s109 + $0x290] sm:$0xff] %v113
        %197 = vst [vmem:[%s109 + $0x298] sm:$0xff] %v113
        %198 = vst [vmem:[%s109 + $0x2a0] sm:$0xff] %v113
        %199 = vst [vmem:[%s109 + $0x2a8] sm:$0xff] %v113
        %200 = vst [vmem:[%s109 + $0x2b0] sm:$0xff] %v113
        %201 = vst [vmem:[%s109 + $0x2b8] sm:$0xff] %v113
        %202 = vst [vmem:[%s109 + $0x2c0] sm:$0xff] %v113
        %203 = vst [vmem:[%s109 + $0x2c8] sm:$0xff] %v113
        %204 = vst [vmem:[%s109 + $0x2d0] sm:$0xff] %v113
        %205 = vst [vmem:[%s109 + $0x2d8] sm:$0xff] %v113
        %206 = vst [vmem:[%s109 + $0x2e0] sm:$0xff] %v113
        %207 = vst [vmem:[%s109 + $0x2e8] sm:$0xff] %v113
        %208 = vst [vmem:[%s109 + $0x2f0] sm:$0xff] %v113
        %209 = vst [vmem:[%s109 + $0x2f8] sm:$0xff] %v113
        %210 = vst [vmem:[%s109 + $0x300] sm:$0xff] %v113
        %211 = vst [vmem:[%s109 + $0x308] sm:$0xff] %v113
        %212 = vst [vmem:[%s109 + $0x310] sm:$0xff] %v113
        %213 = vst [vmem:[%s109 + $0x318] sm:$0xff] %v113
        %214 = vst [vmem:[%s109 + $0x320] sm:$0xff] %v113
        %215 = vst [vmem:[%s109 + $0x328] sm:$0xff] %v113
        %216 = vst [vmem:[%s109 + $0x330] sm:$0xff] %v113
        %217 = vst [vmem:[%s109 + $0x338] sm:$0xff] %v113
        %218 = vst [vmem:[%s109 + $0x340] sm:$0xff] %v113
        %219 = vst [vmem:[%s109 + $0x348] sm:$0xff] %v113
        %220 = vst [vmem:[%s109 + $0x350] sm:$0xff] %v113
        %221 = vst [vmem:[%s109 + $0x358] sm:$0xff] %v113
        %222 = vst [vmem:[%s109 + $0x360] sm:$0xff] %v113
        %223 = vst [vmem:[%s109 + $0x368] sm:$0xff] %v113
        %224 = vst [vmem:[%s109 + $0x370] sm:$0xff] %v113
        %225 = vst [vmem:[%s109 + $0x378] sm:$0xff] %v113
        %226 = vst [vmem:[%s109 + $0x380] sm:$0xff] %v113
        %227 = vst [vmem:[%s109 + $0x388] sm:$0xff] %v113
        %228 = vst [vmem:[%s109 + $0x390] sm:$0xff] %v113
        %229 = vst [vmem:[%s109 + $0x398] sm:$0xff] %v113
        %230 = vst [vmem:[%s109 + $0x3a0] sm:$0xff] %v113
        %231 = vst [vmem:[%s109 + $0x3a8] sm:$0xff] %v113
        %232 = vst [vmem:[%s109 + $0x3b0] sm:$0xff] %v113
        %233 = vst [vmem:[%s109 + $0x3b8] sm:$0xff] %v113
        %234 = vst [vmem:[%s109 + $0x3c0] sm:$0xff] %v113
        %235 = vst [vmem:[%s109 + $0x3c8] sm:$0xff] %v113
        %236 = vst [vmem:[%s109 + $0x3d0] sm:$0xff] %v113
        %237 = vst [vmem:[%s109 + $0x3d8] sm:$0xff] %v113
        %238 = vst [vmem:[%s109 + $0x3e0] sm:$0xff] %v113
        %239 = vst [vmem:[%s109 + $0x3e8] sm:$0xff] %v113
        %240 = vst [vmem:[%s109 + $0x3f0] sm:$0xff] %v113
        %241 = vst [vmem:[%s109 + $0x3f8] sm:$0xff] %v113
        %242 = vst [vmem:[%s109 + $0x400] sm:$0xff] %v113
        %243 = vst [vmem:[%s109 + $0x408] sm:$0xff] %v113
        %244 = vst [vmem:[%s109 + $0x410] sm:$0xff] %v113
        %245 = vst [vmem:[%s109 + $0x418] sm:$0xff] %v113
        %246 = vst [vmem:[%s109 + $0x420] sm:$0xff] %v113
        %247 = vst [vmem:[%s109 + $0x428] sm:$0xff] %v113
        %248 = vst [vmem:[%s109 + $0x430] sm:$0xff] %v113
        %249 = vst [vmem:[%s109 + $0x438] sm:$0xff] %v113
        %250 = vst [vmem:[%s109 + $0x440] sm:$0xff] %v113
        %251 = vst [vmem:[%s109 + $0x448] sm:$0xff] %v113
        %252 = vst [vmem:[%s109 + $0x450] sm:$0xff] %v113
        %253 = vst [vmem:[%s109 + $0x458] sm:$0xff] %v113
        %254 = vst [vmem:[%s109 + $0x460] sm:$0xff] %v113
        %255 = vst [vmem:[%s109 + $0x468] sm:$0xff] %v113
        %256 = vst [vmem:[%s109 + $0x470] sm:$0xff] %v113
        %257 = vst [vmem:[%s109 + $0x478] sm:$0xff] %v113
        %258 = vst [vmem:[%s109 + $0x480] sm:$0xff] %v113
        %259 = vst [vmem:[%s109 + $0x488] sm:$0xff] %v113
        %260 = vst [vmem:[%s109 + $0x490] sm:$0xff] %v113
        %261 = vst [vmem:[%s109 + $0x498] sm:$0xff] %v113
        %262 = vst [vmem:[%s109 + $0x4a0] sm:$0xff] %v113
        %263 = vst [vmem:[%s109 + $0x4a8] sm:$0xff] %v113
        %264 = vst [vmem:[%s109 + $0x4b0] sm:$0xff] %v113
        %265 = vst [vmem:[%s109 + $0x4b8] sm:$0xff] %v113
        %266 = vst [vmem:[%s109 + $0x4c0] sm:$0xff] %v113
        %267 = vst [vmem:[%s109 + $0x4c8] sm:$0xff] %v113
        %268 = vst [vmem:[%s109 + $0x4d0] sm:$0xff] %v113
        %269 = vst [vmem:[%s109 + $0x4d8] sm:$0xff] %v113
        %270 = vst [vmem:[%s109 + $0x4e0] sm:$0xff] %v113
        %271 = vst [vmem:[%s109 + $0x4e8] sm:$0xff] %v113
        %272 = vst [vmem:[%s109 + $0x4f0] sm:$0xff] %v113
        %273 = vst [vmem:[%s109 + $0x4f8] sm:$0xff] %v113
        %274 = vst [vmem:[%s109 + $0x500] sm:$0xff] %v113
        %275 = vst [vmem:[%s109 + $0x508] sm:$0xff] %v113
        %276 = vst [vmem:[%s109 + $0x510] sm:$0xff] %v113
        %277 = vst [vmem:[%s109 + $0x518] sm:$0xff] %v113
        %278 = vst [vmem:[%s109 + $0x520] sm:$0xff] %v113
        %279 = vst [vmem:[%s109 + $0x528] sm:$0xff] %v113
        %280 = vst [vmem:[%s109 + $0x530] sm:$0xff] %v113
        %281 = vst [vmem:[%s109 + $0x538] sm:$0xff] %v113
        %282 = vst [vmem:[%s109 + $0x540] sm:$0xff] %v113
        %283 = vst [vmem:[%s109 + $0x548] sm:$0xff] %v113
        %284 = vst [vmem:[%s109 + $0x550] sm:$0xff] %v113
        %285 = vst [vmem:[%s109 + $0x558] sm:$0xff] %v113
        %286 = vst [vmem:[%s109 + $0x560] sm:$0xff] %v113
        %287 = vst [vmem:[%s109 + $0x568] sm:$0xff] %v113
        %288 = vst [vmem:[%s109 + $0x570] sm:$0xff] %v113
        %289 = vst [vmem:[%s109 + $0x578] sm:$0xff] %v113
        %290 = vst [vmem:[%s109 + $0x580] sm:$0xff] %v113
        %291 = vst [vmem:[%s109 + $0x588] sm:$0xff] %v113
        %292 = vst [vmem:[%s109 + $0x590] sm:$0xff] %v113
        %293 = vst [vmem:[%s109 + $0x598] sm:$0xff] %v113
        %294 = vst [vmem:[%s109 + $0x5a0] sm:$0xff] %v113
        %295 = vst [vmem:[%s109 + $0x5a8] sm:$0xff] %v113
        %296 = vst [vmem:[%s109 + $0x5b0] sm:$0xff] %v113
        %297 = vst [vmem:[%s109 + $0x5b8] sm:$0xff] %v113
        %298 = vst [vmem:[%s109 + $0x5c0] sm:$0xff] %v113
        %299 = vst [vmem:[%s109 + $0x5c8] sm:$0xff] %v113
        %300 = vst [vmem:[%s109 + $0x5d0] sm:$0xff] %v113
        %301 = vst [vmem:[%s109 + $0x5d8] sm:$0xff] %v113
        %302 = vst [vmem:[%s109 + $0x5e0] sm:$0xff] %v113
        %303 = vst [vmem:[%s109 + $0x5e8] sm:$0xff] %v113
        %304 = vst [vmem:[%s109 + $0x5f0] sm:$0xff] %v113
        %305 = vst [vmem:[%s109 + $0x5f8] sm:$0xff] %v113
        %306 = vst [vmem:[%s109 + $0x600] sm:$0xff] %v113
        %307 = vst [vmem:[%s109 + $0x608] sm:$0xff] %v113
        %308 = vst [vmem:[%s109 + $0x610] sm:$0xff] %v113
        %309 = vst [vmem:[%s109 + $0x618] sm:$0xff] %v113
        %310 = vst [vmem:[%s109 + $0x620] sm:$0xff] %v113
        %311 = vst [vmem:[%s109 + $0x628] sm:$0xff] %v113
        %312 = vst [vmem:[%s109 + $0x630] sm:$0xff] %v113
        %313 = vst [vmem:[%s109 + $0x638] sm:$0xff] %v113
        %314 = vst [vmem:[%s109 + $0x640] sm:$0xff] %v113
        %315 = vst [vmem:[%s109 + $0x648] sm:$0xff] %v113
        %316 = vst [vmem:[%s109 + $0x650] sm:$0xff] %v113
        %317 = vst [vmem:[%s109 + $0x658] sm:$0xff] %v113
        %318 = vst [vmem:[%s109 + $0x660] sm:$0xff] %v113
        %319 = vst [vmem:[%s109 + $0x668] sm:$0xff] %v113
        %320 = vst [vmem:[%s109 + $0x670] sm:$0xff] %v113
        %321 = vst [vmem:[%s109 + $0x678] sm:$0xff] %v113
        %322 = vst [vmem:[%s109 + $0x680] sm:$0xff] %v113
        %323 = vst [vmem:[%s109 + $0x688] sm:$0xff] %v113
        %324 = vst [vmem:[%s109 + $0x690] sm:$0xff] %v113
        %325 = vst [vmem:[%s109 + $0x698] sm:$0xff] %v113
        %326 = vst [vmem:[%s109 + $0x6a0] sm:$0xff] %v113
        %327 = vst [vmem:[%s109 + $0x6a8] sm:$0xff] %v113
        %328 = vst [vmem:[%s109 + $0x6b0] sm:$0xff] %v113
        %329 = vst [vmem:[%s109 + $0x6b8] sm:$0xff] %v113
        %330 = vst [vmem:[%s109 + $0x6c0] sm:$0xff] %v113
        %331 = vst [vmem:[%s109 + $0x6c8] sm:$0xff] %v113
        %332 = vst [vmem:[%s109 + $0x6d0] sm:$0xff] %v113
        %333 = vst [vmem:[%s109 + $0x6d8] sm:$0xff] %v113
        %334 = vst [vmem:[%s109 + $0x6e0] sm:$0xff] %v113
        %335 = vst [vmem:[%s109 + $0x6e8] sm:$0xff] %v113
        %336 = vst [vmem:[%s109 + $0x6f0] sm:$0xff] %v113
        %337 = vst [vmem:[%s109 + $0x6f8] sm:$0xff] %v113
        %338 = vst [vmem:[%s109 + $0x700] sm:$0xff] %v113
        %339 = vst [vmem:[%s109 + $0x708] sm:$0xff] %v113
        %340 = vst [vmem:[%s109 + $0x710] sm:$0xff] %v113
        %341 = vst [vmem:[%s109 + $0x718] sm:$0xff] %v113
        %342 = vst [vmem:[%s109 + $0x720] sm:$0xff] %v113
        %343 = vst [vmem:[%s109 + $0x728] sm:$0xff] %v113
        %344 = vst [vmem:[%s109 + $0x730] sm:$0xff] %v113
        %345 = vst [vmem:[%s109 + $0x738] sm:$0xff] %v113
        %346 = vst [vmem:[%s109 + $0x740] sm:$0xff] %v113
        %347 = vst [vmem:[%s109 + $0x748] sm:$0xff] %v113
        %348 = vst [vmem:[%s109 + $0x750] sm:$0xff] %v113
        %349 = vst [vmem:[%s109 + $0x758] sm:$0xff] %v113
        %350 = vst [vmem:[%s109 + $0x760] sm:$0xff] %v113
        %351 = vst [vmem:[%s109 + $0x768] sm:$0xff] %v113
        %352 = vst [vmem:[%s109 + $0x770] sm:$0xff] %v113
        %353 = vst [vmem:[%s109 + $0x778] sm:$0xff] %v113
        %354 = vst [vmem:[%s109 + $0x780] sm:$0xff] %v113
        %355 = vst [vmem:[%s109 + $0x788] sm:$0xff] %v113
        %356 = vst [vmem:[%s109 + $0x790] sm:$0xff] %v113
        %357 = vst [vmem:[%s109 + $0x798] sm:$0xff] %v113
        %358 = vst [vmem:[%s109 + $0x7a0] sm:$0xff] %v113
        %359 = vst [vmem:[%s109 + $0x7a8] sm:$0xff] %v113
        %360 = vst [vmem:[%s109 + $0x7b0] sm:$0xff] %v113
        %361 = vst [vmem:[%s109 + $0x7b8] sm:$0xff] %v113
        %362 = vst [vmem:[%s109 + $0x7c0] sm:$0xff] %v113
        %363 = vst [vmem:[%s109 + $0x7c8] sm:$0xff] %v113
        %364 = vst [vmem:[%s109 + $0x7d0] sm:$0xff] %v113
        %365 = vst [vmem:[%s109 + $0x7d8] sm:$0xff] %v113
        %366 = vst [vmem:[%s109 + $0x7e0] sm:$0xff] %v113
        %367 = vst [vmem:[%s109 + $0x7e8] sm:$0xff] %v113
        %368 = vst [vmem:[%s109 + $0x7f0] sm:$0xff] %v113
        %369 = vst [vmem:[%s109 + $0x7f8] sm:$0xff] %v113
        %s370 = sand.u32 %s59, 1
        %s371 = scalar_lea.sflag [#allocation4], %s370
        %s372 = sand.u32 %s59, 1
        %s373 = smul.addr %s372, 2048
        %s374 = scalar_lea.vmem [#allocation3], %s373
        // Predicated region
        $region25: #{tpu_custom_call.1} parent=23 // pred_check
          %p375 = pneg %p69
        $region26: #{tpu_custom_call.1} parent=23 // pred_check_branch
          %377 = sbr.rel (%p375) target = $region28
        $region27: #{tpu_custom_call.1} parent=23 // pred_region
          %s378 = smul.u32 32, %s20
          %s379 = smul.u32 8, %s21
          %381 = vsyncadd %s371, 0
          %s382 = smul.addr %s378, 8
          %s383 = sadd.s32 %s379, %s382
          %s384 = smul.addr %s383, 8
          %s385 = scalar_lea.hbm %s1, %s384
          %s386 = sshll.u32 %s374, 4
          %s387 = int_to_ptr.vmem [resolvable:$true] %s386
          %s388 = sshll.u32 %s385, 4
          %s389 = int_to_ptr.hbm [resolvable:$true] %s388
          %394 = dma.vmem_to_hbm [thread:$0]  %s387, 32768, %s389, %s371, 1024, 1024, 64
        $region28: #{tpu_custom_call.1} parent=23 // pred_fallthru
          _
      $region24: #{tpu_custom_call.1} parent=5 // pred_fallthru
        _
      %p395 = scmp.le.s32.totalorder 2, %s11
      // Predicated region
      $region29: #{tpu_custom_call.1} parent=5 // pred_check
        %p396 = pneg %p395
      $region30: #{tpu_custom_call.1} parent=5 // pred_check_branch
        %398 = sbr.rel (%p396) target = $region32
      $region31: #{tpu_custom_call.1} parent=5 // pred_region
        %s399 = ssub.s32 %s11, 2
        // Predicated region
        $region33: #{tpu_custom_call.1} parent=31 // pred_check
          %p400 = pneg %p75
        $region34: #{tpu_custom_call.1} parent=31 // pred_check_branch
          %402 = sbr.rel (%p400) target = $region36
        $region35: #{tpu_custom_call.1} parent=31 // pred_region
          %s403 = sand.u32 %s60, 1
          %s404 = scalar_lea.sflag [#allocation4], %s403
          %s405 = sand.u32 %s60, 1
          %s406 = smul.addr %s405, 2048
          %s407 = scalar_lea.vmem [#allocation3], %s406
          %409 = dma.done %s404, 32768
        $region36: #{tpu_custom_call.1} parent=31 // pred_fallthru
          _
      $region32: #{tpu_custom_call.1} parent=5 // pred_fallthru
        _
    $region6: #{tpu_custom_call.1} parent=1 // loop_footer
      %s15 = sadd.s32 1, %s11
    $region7: #{tpu_custom_call.1} parent=1 // loop_footer_branch
      %10 = sbr.rel target = $region3
    $region8: #{tpu_custom_call.1} parent=1 // loop_exit
      _
    %410 = vsyncpa [#allocation4], 1
    %s411 = scalar_lea.sflag [#allocation4], 1
    %412 = vsyncpa %s411, 1

</llo_original>
